<compile_context>
chip_gen: v7x
topology: tpu7x:2x2x1
jax: 0.10.0
libtpu: 0.0.40
codegen_flags: <defaults>
</compile_context>

<pallas_src>
import functools

import numpy as np
import jax
import jax.numpy as jnp
from jax import lax
from jax.experimental import pallas as pl
from jax.experimental.pallas import tpu as pltpu


def _vq_kernel(x_ref, e_ref, e2_ref, q_ref, idx_ref, cnt_ref, sq_ref, *,
               n_valid: int, tile_n: int, num_embeddings: int):
    K = num_embeddings
    i = pl.program_id(0)

    x = x_ref[...].astype(jnp.float32)      # [TN, D]  input rows (native dtype)
    e = e_ref[...]                          # [K, D]   f32 codebook (resident)
    e2 = e2_ref[...]                        # [K, 1]   hoisted ||e_k||^2

    # Transposed distances, up to the per-row constant ||x_n||^2 (which cannot
    # change the argmin):  dist_t[k, n] = ||e_k||^2 - 2 <x_n, e_k>.
    dots_t = lax.dot_general(e, x, (((1,), (1,)), ((), ())),
                             preferred_element_type=jnp.float32)       # [K, TN]
    dist_t = e2 - 2.0 * dots_t                                         # [K, TN]

    # First-occurrence argmin over the codebook axis (matches torch.argmin).
    min_d = jnp.min(dist_t, axis=0, keepdims=True)                     # [1, TN]
    code = lax.broadcasted_iota(jnp.int32, (K, tile_n), 0)             # [K, TN]
    idx = jnp.min(jnp.where(dist_t == min_d, code, K), axis=0,
                  keepdims=True)                                       # [1, TN]

    # Gather the selected codebook rows as an exact one-hot matmul on the MXU.
    onehot_t = (code == idx).astype(jnp.float32)                       # [K, TN]
    q = lax.dot_general(onehot_t, e, (((0,), (0,)), ((), ())),
                        preferred_element_type=jnp.float32)            # [TN, D]

    diff = q - x
    if n_valid % tile_n != 0:
        # Mask padded rows out of the reductions; padded q/idx rows are written
        # but sliced off in the wrapper.
        base = i * tile_n
        valid_row = (base + lax.broadcasted_iota(jnp.int32, (tile_n, 1), 0)) < n_valid
        valid_col = (base + lax.broadcasted_iota(jnp.int32, (1, tile_n), 1)) < n_valid
        sq = jnp.sum(jnp.where(valid_row, diff * diff, 0.0))
        counts = jnp.sum(jnp.where(valid_col, onehot_t, 0.0), axis=1)  # [K]
    else:
        sq = jnp.sum(diff * diff)
        counts = jnp.sum(onehot_t, axis=1)                             # [K]

    q_ref[...] = q.astype(q_ref.dtype)
    idx_ref[...] = idx.reshape(1, 1, tile_n)          # lane-dense index store
    cnt_ref[...] = counts.reshape(1, 1, K)            # per-tile code counts
    sq_ref[...] = jnp.broadcast_to(sq, (1, 1, 128)).astype(jnp.float32)


def _pick_tile_n(n: int, k: int) -> int:
    # Bound the two [K, TN] f32 intermediates (distances + one-hot) to ~6 MiB so
    # the kernel fits comfortably in scoped VMEM on v5e / v6e / v7x alike.
    cap = (6 * 1024 * 1024) // (8 * max(k, 1))
    cap = max(128, (cap // 128) * 128)
    tn = min(1024, cap)
    n_up = pl.cdiv(n, 128) * 128        # do not over-tile tiny inputs
    return max(128, min(tn, n_up))


def vector_quantizer_forward(inputs, embedding, commitment_cost=0.25):
    """Forward pass of VectorQuantizer (eval semantics).

    Returns (quantized, loss, {'perplexity': ..., 'encodings': ...}) matching
    the PyTorch module's forward outputs.
    """
    # TODO(synk): training-mode EMA buffer updates (ema_cluster_size / ema_w /
    # embedding.weight in-place mutation) are stateful side effects that do not
    # affect this call's returned tensors; not implemented here.
    emb = embedding.astype(jnp.float32)
    K, D = emb.shape
    input_shape = inputs.shape
    # NOTE: the PyTorch module reshapes without an NHWC permute; we match it.
    flat = inputs.reshape(-1, D)
    N = flat.shape[0]

    tile_n = _pick_tile_n(N, K)
    n_pad = pl.cdiv(N, tile_n) * tile_n
    num_tiles = n_pad // tile_n
    if n_pad != N:
        flat = jnp.pad(flat, ((0, n_pad - N), (0, 0)))

    e2 = jnp.sum(emb * emb, axis=1, keepdims=True)     # [K, 1], hoisted once

    kernel = functools.partial(_vq_kernel, n_valid=N, tile_n=tile_n,
                               num_embeddings=K)

    in_bytes = flat.size * flat.dtype.itemsize + emb.size * 4 + e2.size * 4
    out_bytes = (n_pad * D * inputs.dtype.itemsize
                 + num_tiles * (tile_n + K + 128) * 4)
    cost = pl.CostEstimate(flops=4 * N * K * D, transcendentals=0,
                           bytes_accessed=in_bytes + out_bytes)

    q_pad, idx_t, cnt_t, sq_t = pl.pallas_call(
        kernel,
        grid=(num_tiles,),
        in_specs=[
            pl.BlockSpec((tile_n, D), lambda i: (i, 0)),       # x rows (pipelined)
            pl.BlockSpec((K, D), lambda i: (0, 0)),            # codebook (resident)
            pl.BlockSpec((K, 1), lambda i: (0, 0)),            # ||e||^2 (resident)
        ],
        out_specs=(
            pl.BlockSpec((tile_n, D), lambda i: (i, 0)),        # quantized rows
            pl.BlockSpec((1, 1, tile_n), lambda i: (i, 0, 0)),  # indices (lane-dense)
            pl.BlockSpec((1, 1, K), lambda i: (i, 0, 0)),       # per-tile counts
            pl.BlockSpec((1, 1, 128), lambda i: (i, 0, 0)),     # per-tile sum((q-x)^2)
        ),
        out_shape=(
            jax.ShapeDtypeStruct((n_pad, D), inputs.dtype),
            jax.ShapeDtypeStruct((num_tiles, 1, tile_n), jnp.int32),
            jax.ShapeDtypeStruct((num_tiles, 1, K), jnp.float32),
            jax.ShapeDtypeStruct((num_tiles, 1, 128), jnp.float32),
        ),
        compiler_params=pltpu.CompilerParams(
            dimension_semantics=("parallel",),
            vmem_limit_bytes=32 * 1024 * 1024),
        cost_estimate=cost,
    )(flat, emb, e2)

    quantized = q_pad[:N].reshape(input_shape)
    encodings = idx_t.reshape(-1)[:N]
    counts = jnp.sum(cnt_t.reshape(num_tiles, K), axis=0)
    sum_sq = jnp.sum(sq_t[:, 0, 0])

    # q_latent_loss and e_latent_loss share the same forward value (the detach
    # only changes gradients), so loss = (1 + commitment_cost) * mse.
    mse = sum_sq / (N * D)
    loss = (1.0 + float(commitment_cost)) * mse

    avg_probs = counts / N
    perplexity = jnp.exp(-jnp.sum(avg_probs * jnp.log(avg_probs + 1e-10)))

    # Straight-through estimator: forward value of inputs + (q - inputs).detach()
    # is q itself; only gradients differ.
    return quantized, loss, {"perplexity": perplexity, "encodings": encodings}


def _reference_forward(inputs, emb, cc):
    """Plain-JAX reference mirroring the PyTorch forward (eval)."""
    K, D = emb.shape
    shp = inputs.shape
    flat = inputs.reshape(-1, D).astype(jnp.float32)
    dist = (jnp.sum(flat ** 2, 1, keepdims=True) + jnp.sum(emb ** 2, 1)
            - 2.0 * flat @ emb.T)
    idx = jnp.argmin(dist, axis=1)
    q = emb[idx].reshape(shp)
    mse = jnp.mean((q - flat.reshape(shp)) ** 2)
    loss = (1.0 + cc) * mse
    p = jnp.mean(jax.nn.one_hot(idx, K, dtype=jnp.float32), axis=0)
    ppl = jnp.exp(-jnp.sum(p * jnp.log(p + 1e-10)))
    return q, loss, ppl, idx


if __name__ == "__main__":
    # Module hyperparameters (small, TPU-friendly).
    num_embeddings = 128     # codebook size K
    embedding_dim = 32       # D
    commitment_cost = 0.25

    key = jax.random.PRNGKey(0)
    k_emb, k_x = jax.random.split(key)

    # Deterministic parameter init: uniform(-1/K, 1/K), as in the module.
    embedding = jax.random.uniform(
        k_emb, (num_embeddings, embedding_dim), dtype=jnp.float32,
        minval=-1.0 / num_embeddings, maxval=1.0 / num_embeddings)

    # Inputs: NCHW [B, D, H, W]  (flattened row-major to [-1, D] like the module)
    x = jax.random.normal(k_x, (2, embedding_dim, 8, 8), dtype=jnp.float32)

    quantized, loss, info = vector_quantizer_forward(x, embedding, commitment_cost)
    jax.block_until_ready((quantized, loss, info["perplexity"], info["encodings"]))

    # Sanity check against a plain-JAX reference of the same math.
    q_ref, loss_ref, ppl_ref, idx_ref = _reference_forward(x, embedding,
                                                           commitment_cost)
    assert quantized.shape == x.shape
    np.testing.assert_allclose(np.asarray(quantized), np.asarray(q_ref),
                               rtol=1e-5, atol=1e-5)
    np.testing.assert_allclose(float(loss), float(loss_ref), rtol=1e-5, atol=1e-6)
    np.testing.assert_allclose(float(info["perplexity"]), float(ppl_ref),
                               rtol=1e-4, atol=1e-4)
    np.testing.assert_array_equal(np.asarray(info["encodings"]),
                                  np.asarray(idx_ref))

    print("KERNEL_OK")
</pallas_src>

<mosaic_0001>
module attributes {stable_mosaic.version = 11 : i64} {
  func.func @_vq_kernel(%arg0: i32, %arg1: memref<128x32xf32, #tpu.memory_space<vmem>>, %arg2: memref<128x32xf32, #tpu.memory_space<vmem>>, %arg3: memref<128x1xf32, #tpu.memory_space<vmem>>, %arg4: memref<128x32xf32, #tpu.memory_space<vmem>>, %arg5: memref<1x1x128xi32, #tpu.memory_space<vmem>>, %arg6: memref<1x1x128xf32, #tpu.memory_space<vmem>>, %arg7: memref<1x1x128xf32, #tpu.memory_space<vmem>>) attributes {dimension_semantics = [#tpu.dimension_semantics<parallel>], iteration_bounds = array<i64: 1>, scalar_prefetch = 0 : i64, scratch_operands = 0 : i64, tpu.core_type = #tpu.core_type<tc>, window_params = [{transform_indices = @transform_0, window_bounds = array<i64: 128, 32>}, {pipeline_mode = #tpu.pipeline_mode<synchronous>, transform_indices = @transform_1, window_bounds = array<i64: 128, 32>}, {pipeline_mode = #tpu.pipeline_mode<synchronous>, transform_indices = @transform_2, window_bounds = array<i64: 128, 1>}, {transform_indices = @transform_3, window_bounds = array<i64: 128, 32>}, {transform_indices = @transform_4, window_bounds = array<i64: 1, 1, 128>}, {transform_indices = @transform_5, window_bounds = array<i64: 1, 1, 128>}, {transform_indices = @transform_6, window_bounds = array<i64: 1, 1, 128>}]} {
    %c0 = arith.constant 0 : index
    %c0_0 = arith.constant 0 : index
    %0 = vector.load %arg1[%c0, %c0_0] : memref<128x32xf32, #tpu.memory_space<vmem>>, vector<128x32xf32>
    %c0_1 = arith.constant 0 : index
    %c0_2 = arith.constant 0 : index
    %1 = vector.load %arg2[%c0_1, %c0_2] : memref<128x32xf32, #tpu.memory_space<vmem>>, vector<128x32xf32>
    %c0_3 = arith.constant 0 : index
    %c0_4 = arith.constant 0 : index
    %2 = vector.load %arg3[%c0_3, %c0_4] : memref<128x1xf32, #tpu.memory_space<vmem>>, vector<128x1xf32>
    %cst = arith.constant dense<0.000000e+00> : vector<128x128xf32>
    %3 = tpu.matmul %1, %0, %cst {dimension_numbers = #tpu.dot_dimension_numbers<[1], [1], [0], [0], [0, 0, 1, 0], [], []>} : vector<128x32xf32>, vector<128x32xf32>, vector<128x128xf32> -> vector<128x128xf32>
    %cst_5 = arith.constant 2.000000e+00 : f32
    %4 = vector.broadcast %cst_5 : f32 to vector<128x128xf32>
    %5 = arith.mulf %4, %3 : vector<128x128xf32>
    %6 = vector.broadcast %2 : vector<128x1xf32> to vector<128x128xf32>
    %7 = arith.subf %6, %5 : vector<128x128xf32>
    %cst_6 = arith.constant dense<0x7F800000> : vector<128xf32>
    %8 = vector.multi_reduction <minimumf>, %7, %cst_6 [0] : vector<128x128xf32> to vector<128xf32>
    %9 = vector.shape_cast %8 : vector<128xf32> to vector<1x128xf32>
    %10 = tpu.iota {dimensions = array<i32: 0>} : vector<128x128xi32>
    %11 = vector.broadcast %9 : vector<1x128xf32> to vector<128x128xf32>
    %12 = arith.cmpf oeq, %7, %11 : vector<128x128xf32>
    %c128_i32 = arith.constant 128 : i32
    %13 = vector.broadcast %c128_i32 : i32 to vector<128x128xi32>
    %14 = arith.select %12, %10, %13 : vector<128x128xi1>, vector<128x128xi32>
    %cst_7 = arith.constant dense<2147483647> : vector<128xi32>
    %15 = vector.multi_reduction <minsi>, %14, %cst_7 [0] : vector<128x128xi32> to vector<128xi32>
    %16 = vector.shape_cast %15 : vector<128xi32> to vector<1x128xi32>
    %17 = vector.broadcast %16 : vector<1x128xi32> to vector<128x128xi32>
    %18 = arith.cmpi eq, %10, %17 : vector<128x128xi32>
    %19 = arith.extui %18 : vector<128x128xi1> to vector<128x128xi32>
    %20 = arith.sitofp %19 : vector<128x128xi32> to vector<128x128xf32>
    %cst_8 = arith.constant dense<0.000000e+00> : vector<128x32xf32>
    %21 = tpu.matmul %20, %1, %cst_8 {dimension_numbers = #tpu.dot_dimension_numbers<[0], [0], [1], [1], [0, 1, 1, 1], [], []>} : vector<128x128xf32>, vector<128x32xf32>, vector<128x32xf32> -> vector<128x32xf32>
    %22 = arith.subf %21, %0 : vector<128x32xf32>
    %23 = arith.mulf %22, %22 : vector<128x32xf32>
    %24 = vector.shape_cast %23 : vector<128x32xf32> to vector<1x128x32xf32>
    %cst_9 = arith.constant dense<0.000000e+00> : vector<1xf32>
    %25 = vector.multi_reduction <add>, %24, %cst_9 [1, 2] : vector<1x128x32xf32> to vector<1xf32>
    %26 = vector.shape_cast %25 : vector<1xf32> to vector<1x1x1xf32>
    %27 = vector.extract %26[0, 0, 0] : f32 from vector<1x1x1xf32>
    %cst_10 = arith.constant dense<0.000000e+00> : vector<128xf32>
    %28 = vector.multi_reduction <add>, %20, %cst_10 [1] : vector<128x128xf32> to vector<128xf32>
    %c0_11 = arith.constant 0 : index
    %c0_12 = arith.constant 0 : index
    %29 = vector.load %arg4[%c0_11, %c0_12] : memref<128x32xf32, #tpu.memory_space<vmem>>, vector<128x32xf32>
    tpu.vector_store %arg4[%c0_11, %c0_12], %21 {strides = array<i32>} : memref<128x32xf32, #tpu.memory_space<vmem>>, vector<128x32xf32>,
    %30 = vector.shape_cast %16 : vector<1x128xi32> to vector<1x1x128xi32>
    %c0_13 = arith.constant 0 : index
    %c0_14 = arith.constant 0 : index
    %c0_15 = arith.constant 0 : index
    %31 = vector.load %arg5[%c0_13, %c0_14, %c0_15] : memref<1x1x128xi32, #tpu.memory_space<vmem>>, vector<1x1x128xi32>
    tpu.vector_store %arg5[%c0_13, %c0_14, %c0_15], %30 {strides = array<i32>} : memref<1x1x128xi32, #tpu.memory_space<vmem>>, vector<1x1x128xi32>,
    %32 = vector.shape_cast %28 : vector<128xf32> to vector<1x1x128xf32>
    %c0_16 = arith.constant 0 : index
    %c0_17 = arith.constant 0 : index
    %c0_18 = arith.constant 0 : index
    %33 = vector.load %arg6[%c0_16, %c0_17, %c0_18] : memref<1x1x128xf32, #tpu.memory_space<vmem>>, vector<1x1x128xf32>
    tpu.vector_store %arg6[%c0_16, %c0_17, %c0_18], %32 {strides = array<i32>} : memref<1x1x128xf32, #tpu.memory_space<vmem>>, vector<1x1x128xf32>,
    %34 = vector.broadcast %27 : f32 to vector<1x1x128xf32>
    %c0_19 = arith.constant 0 : index
    %c0_20 = arith.constant 0 : index
    %c0_21 = arith.constant 0 : index
    %35 = vector.load %arg7[%c0_19, %c0_20, %c0_21] : memref<1x1x128xf32, #tpu.memory_space<vmem>>, vector<1x1x128xf32>
    tpu.vector_store %arg7[%c0_19, %c0_20, %c0_21], %34 {strides = array<i32>} : memref<1x1x128xf32, #tpu.memory_space<vmem>>, vector<1x1x128xf32>,
    return
  }
  func.func @transform_0(%arg0: i32) -> (i32, i32) {
    %c0_i32 = arith.constant 0 : i32
    %c0_i32_0 = arith.constant 0 : i32
    return %arg0, %c0_i32 : i32, i32
  }
  func.func @transform_1(%arg0: i32) -> (i32, i32) {
    %c0_i32 = arith.constant 0 : i32
    %c0_i32_0 = arith.constant 0 : i32
    %c0_i32_1 = arith.constant 0 : i32
    return %c0_i32, %c0_i32_0 : i32, i32
  }
  func.func @transform_2(%arg0: i32) -> (i32, i32) {
    %c0_i32 = arith.constant 0 : i32
    %c0_i32_0 = arith.constant 0 : i32
    %c0_i32_1 = arith.constant 0 : i32
    return %c0_i32, %c0_i32_0 : i32, i32
  }
  func.func @transform_3(%arg0: i32) -> (i32, i32) {
    %c0_i32 = arith.constant 0 : i32
    %c0_i32_0 = arith.constant 0 : i32
    return %arg0, %c0_i32 : i32, i32
  }
  func.func @transform_4(%arg0: i32) -> (i32, i32, i32) {
    %c0_i32 = arith.constant 0 : i32
    %c0_i32_0 = arith.constant 0 : i32
    %c0_i32_1 = arith.constant 0 : i32
    return %arg0, %c0_i32, %c0_i32_0 : i32, i32, i32
  }
  func.func @transform_5(%arg0: i32) -> (i32, i32, i32) {
    %c0_i32 = arith.constant 0 : i32
    %c0_i32_0 = arith.constant 0 : i32
    %c0_i32_1 = arith.constant 0 : i32
    return %arg0, %c0_i32, %c0_i32_0 : i32, i32, i32
  }
  func.func @transform_6(%arg0: i32) -> (i32, i32, i32) {
    %c0_i32 = arith.constant 0 : i32
    %c0_i32_0 = arith.constant 0 : i32
    %c0_i32_1 = arith.constant 0 : i32
    return %arg0, %c0_i32, %c0_i32_0 : i32, i32, i32
  }
}

</mosaic_0001>

<llo_original>
// kernel: tpu_custom_call.1
$region0: #{tpu_custom_call.1}
  #allocation0 [shape = 'u32[]', space=smem, size = 0x4, offset = 0x4, fixed_abs, tag = 'smem constant byte address 0x4 - core index']
  #allocation1 [shape = 'u32[144,128]{1,0:T(1,128)}', space=vmem, size = 0x12000, scoped, tag = 'internal scratch']
  %s0 = inlined_call_operand.vmem [shape: f32[128,32], index: 0, kind: input, shape index: {}]
  %s1 = inlined_call_operand.vmem [shape: f32[128,32], index: 1, kind: input, shape index: {}]
  %s2 = inlined_call_operand.vmem [shape: f32[128,1], index: 2, kind: input, shape index: {}]
  %s3 = inlined_call_operand.vmem [shape: f32[128,32], index: 3, kind: output, shape index: {0}]
  %s4 = inlined_call_operand.hbm [shape: s32[1,1,128], index: 4, kind: output, shape index: {1}]
  %s5 = inlined_call_operand.hbm [shape: f32[1,1,128], index: 5, kind: output, shape index: {2}]
  %s6 = inlined_call_operand.hbm [shape: f32[1,1,128], index: 6, kind: output, shape index: {3}]
  %7 = xla_tuple %s3, %s4, %s5, %s6
  %s8 = sld [smem:[#allocation0]]
  $region46: #{tpu_custom_call.1} parent=0
    _
  %s10 = ssub.s32 1, %s8
  %s11 = scalar_select 0, %s10, %s8
  $region1: #{tpu_custom_call.1} parent=0
    #allocation2 [shape = 'u8[512]{0}', space=vmem, size = 0x400, scoped, tag = 'output window, operand 1, single buffered']
    #allocation3 [shape = 's32[1]{0}', space=sflag, size = 0x4, scoped, tag = 'scoped memory for tpu_custom_call.1']
    #allocation4 [shape = 'u8[512]{0}', space=vmem, size = 0x400, scoped, tag = 'output window, operand 2, single buffered']
    #allocation5 [shape = 's32[1]{0}', space=sflag, size = 0x4, scoped, tag = 'scoped memory for tpu_custom_call.1']
    #allocation6 [shape = 'u8[512]{0}', space=vmem, size = 0x400, scoped, tag = 'output window, operand 3, single buffered']
    %12 = vsyncpa [#allocation3], 0
    %13 = vsyncpa [#allocation5], 0
    // Predicated region
    $region2: #{tpu_custom_call.1} parent=1 // pred_check
      _
    $region3: #{tpu_custom_call.1} parent=1 // pred_check_branch
      %15 = sbr.rel (0) target = $region5
    $region4: #{tpu_custom_call.1} parent=1 // pred_region
      _
    $region5: #{tpu_custom_call.1} parent=1 // pred_fallthru
      _
    // Predicated region
    $region6: #{tpu_custom_call.1} parent=1 // pred_check
      _
    $region7: #{tpu_custom_call.1} parent=1 // pred_check_branch
      %17 = sbr.rel (0) target = $region9
    $region8: #{tpu_custom_call.1} parent=1 // pred_region
      _
    $region9: #{tpu_custom_call.1} parent=1 // pred_fallthru
      _
    // Predicated region
    $region10: #{tpu_custom_call.1} parent=1 // pred_check
      _
    $region11: #{tpu_custom_call.1} parent=1 // pred_check_branch
      %19 = sbr.rel (0) target = $region13
    $region12: #{tpu_custom_call.1} parent=1 // pred_region
      _
    $region13: #{tpu_custom_call.1} parent=1 // pred_fallthru
      _
    %v20 = vld [vmem:[%s0] sm:$0xff]
    %v21 = vld [vmem:[%s0 + $0x8] sm:$0xff]
    %v22 = vld [vmem:[%s0 + $0x10] sm:$0xff]
    %v23 = vld [vmem:[%s0 + $0x18] sm:$0xff]
    %v24 = vld [vmem:[%s0 + $0x20] sm:$0xff]
    %v25 = vld [vmem:[%s0 + $0x28] sm:$0xff]
    %v26 = vld [vmem:[%s0 + $0x30] sm:$0xff]
    %v27 = vld [vmem:[%s0 + $0x38] sm:$0xff]
    %v28 = vld [vmem:[%s0 + $0x40] sm:$0xff]
    %v29 = vld [vmem:[%s0 + $0x48] sm:$0xff]
    %v30 = vld [vmem:[%s0 + $0x50] sm:$0xff]
    %v31 = vld [vmem:[%s0 + $0x58] sm:$0xff]
    %v32 = vld [vmem:[%s0 + $0x60] sm:$0xff]
    %v33 = vld [vmem:[%s0 + $0x68] sm:$0xff]
    %v34 = vld [vmem:[%s0 + $0x70] sm:$0xff]
    %v35 = vld [vmem:[%s0 + $0x78] sm:$0xff]
    %v36 = vld [vmem:[%s1] sm:$0xff]
    %v37 = vld [vmem:[%s1 + $0x8] sm:$0xff]
    %v38 = vld [vmem:[%s1 + $0x10] sm:$0xff]
    %v39 = vld [vmem:[%s1 + $0x18] sm:$0xff]
    %v40 = vld [vmem:[%s1 + $0x20] sm:$0xff]
    %v41 = vld [vmem:[%s1 + $0x28] sm:$0xff]
    %v42 = vld [vmem:[%s1 + $0x30] sm:$0xff]
    %v43 = vld [vmem:[%s1 + $0x38] sm:$0xff]
    %v44 = vld [vmem:[%s1 + $0x40] sm:$0xff]
    %v45 = vld [vmem:[%s1 + $0x48] sm:$0xff]
    %v46 = vld [vmem:[%s1 + $0x50] sm:$0xff]
    %v47 = vld [vmem:[%s1 + $0x58] sm:$0xff]
    %v48 = vld [vmem:[%s1 + $0x60] sm:$0xff]
    %v49 = vld [vmem:[%s1 + $0x68] sm:$0xff]
    %v50 = vld [vmem:[%s1 + $0x70] sm:$0xff]
    %v51 = vld [vmem:[%s1 + $0x78] sm:$0xff]
    %v52 = vld [vmem:[%s2] sm:$0xff]
    %v53 = vld [vmem:[%s2 + $0x8] sm:$0xff]
    %v54 = vld [vmem:[%s2 + $0x10] sm:$0xff]
    %v55 = vld [vmem:[%s2 + $0x18] sm:$0xff]
    %v56 = vld [vmem:[%s2 + $0x20] sm:$0xff]
    %v57 = vld [vmem:[%s2 + $0x28] sm:$0xff]
    %v58 = vld [vmem:[%s2 + $0x30] sm:$0xff]
    %v59 = vld [vmem:[%s2 + $0x38] sm:$0xff]
    %v60 = vld [vmem:[%s2 + $0x40] sm:$0xff]
    %v61 = vld [vmem:[%s2 + $0x48] sm:$0xff]
    %v62 = vld [vmem:[%s2 + $0x50] sm:$0xff]
    %v63 = vld [vmem:[%s2 + $0x58] sm:$0xff]
    %v64 = vld [vmem:[%s2 + $0x60] sm:$0xff]
    %v65 = vld [vmem:[%s2 + $0x68] sm:$0xff]
    %v66 = vld [vmem:[%s2 + $0x70] sm:$0xff]
    %v67 = vld [vmem:[%s2 + $0x78] sm:$0xff]
    %vm68 = vcmask 261120
    %v70 = vsel %vm68, %v36, 0
    %v73 = vsel %vm68, %v37, 0
    %v76 = vsel %vm68, %v38, 0
    %v79 = vsel %vm68, %v39, 0
    %v82 = vsel %vm68, %v40, 0
    %v85 = vsel %vm68, %v41, 0
    %v88 = vsel %vm68, %v42, 0
    %v91 = vsel %vm68, %v43, 0
    %v94 = vsel %vm68, %v44, 0
    %v97 = vsel %vm68, %v45, 0
    %v100 = vsel %vm68, %v46, 0
    %v103 = vsel %vm68, %v47, 0
    %v106 = vsel %vm68, %v48, 0
    %v109 = vsel %vm68, %v49, 0
    %v112 = vsel %vm68, %v50, 0
    %v115 = vsel %vm68, %v51, 0
    %v118 = vsel %vm68, %v20, 0
    %v121 = vsel %vm68, %v21, 0
    %v124 = vsel %vm68, %v22, 0
    %v127 = vsel %vm68, %v23, 0
    %v130 = vsel %vm68, %v24, 0
    %v133 = vsel %vm68, %v25, 0
    %v136 = vsel %vm68, %v26, 0
    %v139 = vsel %vm68, %v27, 0
    %v142 = vsel %vm68, %v28, 0
    %v145 = vsel %vm68, %v29, 0
    %v148 = vsel %vm68, %v30, 0
    %v151 = vsel %vm68, %v31, 0
    %v154 = vsel %vm68, %v32, 0
    %v157 = vsel %vm68, %v33, 0
    %v160 = vsel %vm68, %v34, 0
    %v163 = vsel %vm68, %v35, 0
    %165 = vmatprep.subr.mxu0 0.0
    %166 = vmatpush1.xpose.msra.mxu0 %v118
    %167 = vmatprep.subr.mxu0 0.0
    %168 = vmatpush1.xpose.msra.mxu0 %v121
    %169 = vmatprep.subr.mxu0 0.0
    %170 = vmatpush1.xpose.msra.mxu0 %v124
    %171 = vmatprep.subr.mxu0 0.0
    %172 = vmatpush1.xpose.msra.mxu0 %v127
    %173 = vmatprep.subr.mxu0 0.0
    %174 = vmatpush1.xpose.msra.mxu0 %v130
    %175 = vmatprep.subr.mxu0 0.0
    %176 = vmatpush1.xpose.msra.mxu0 %v133
    %177 = vmatprep.subr.mxu0 0.0
    %178 = vmatpush1.xpose.msra.mxu0 %v136
    %179 = vmatprep.subr.mxu0 0.0
    %180 = vmatpush1.xpose.msra.mxu0 %v139
    %181 = vmatprep.subr.mxu0 0.0
    %182 = vmatpush1.xpose.msra.mxu0 %v142
    %183 = vmatprep.subr.mxu0 0.0
    %184 = vmatpush1.xpose.msra.mxu0 %v145
    %185 = vmatprep.subr.mxu0 0.0
    %186 = vmatpush1.xpose.msra.mxu0 %v148
    %187 = vmatprep.subr.mxu0 0.0
    %188 = vmatpush1.xpose.msra.mxu0 %v151
    %189 = vmatprep.subr.mxu0 0.0
    %190 = vmatpush1.xpose.msra.mxu0 %v154
    %191 = vmatprep.subr.mxu0 0.0
    %192 = vmatpush1.xpose.msra.mxu0 %v157
    %193 = vmatprep.subr.mxu0 0.0
    %194 = vmatpush1.xpose.msra.mxu0 %v160
    %195 = vmatprep.subr.mxu0 0.0
    %196 = vmatpush1.xpose.msra.mxu0 %v163
    %197 = vmatprep.subr.mxu0 0.0
    %198 = vmatpush1.xpose.msra.mxu0 0.0
    %199 = vmatprep.subr.mxu0 0.0
    %200 = vmatpush1.xpose.msra.mxu0 0.0
    %201 = vmatprep.subr.mxu0 0.0
    %202 = vmatpush1.xpose.msra.mxu0 0.0
    %203 = vmatprep.subr.mxu0 0.0
    %204 = vmatpush1.xpose.msra.mxu0 0.0
    %205 = vmatprep.subr.mxu0 0.0
    %206 = vmatpush1.xpose.msra.mxu0 0.0
    %207 = vmatprep.subr.mxu0 0.0
    %208 = vmatpush1.xpose.msra.mxu0 0.0
    %209 = vmatprep.subr.mxu0 0.0
    %210 = vmatpush1.xpose.msra.mxu0 0.0
    %211 = vmatprep.subr.mxu0 0.0
    %212 = vmatpush1.xpose.msra.mxu0 0.0
    %213 = vmatprep.subr.mxu0 0.0
    %214 = vmatpush1.xpose.msra.mxu0 0.0
    %215 = vmatprep.subr.mxu0 0.0
    %216 = vmatpush1.xpose.msra.mxu0 0.0
    %217 = vmatprep.subr.mxu0 0.0
    %218 = vmatpush1.xpose.msra.mxu0 0.0
    %219 = vmatprep.subr.mxu0 0.0
    %220 = vmatpush1.xpose.msra.mxu0 0.0
    %221 = vmatprep.subr.mxu0 0.0
    %222 = vmatpush1.xpose.msra.mxu0 0.0
    %223 = vmatprep.subr.mxu0 0.0
    %224 = vmatpush1.xpose.msra.mxu0 0.0
    %225 = vmatprep.subr.mxu0 0.0
    %226 = vmatpush1.xpose.msra.mxu0 0.0
    %227 = vmatprep.subr.mxu0 0.0
    %228 = vmatpush1.xpose.msra.mxu0 0.0
    %229 = vmatprep.mubr.f32.mxu0 0.0
    %230 = vmatmul.mubr.f32.gmra.mrb[0].mxu0 %v70
    %v231 = vpop.f32.mrb[0].mxu0
    %v232 = vadd.f32 0.0, %v231
    %v233 = vpop.f32.mrb[0].mxu0
    %234 = vmatprep.mubr.f32.mxu0 0.0
    %235 = vmatmul.mubr.f32.gmra.mrb[0].mxu0 %v73
    %v236 = vpop.f32.mrb[0].mxu0
    %v237 = vadd.f32 0.0, %v236
    %v238 = vpop.f32.mrb[0].mxu0
    %239 = vmatprep.mubr.f32.mxu0 0.0
    %240 = vmatmul.mubr.f32.gmra.mrb[0].mxu0 %v76
    %v241 = vpop.f32.mrb[0].mxu0
    %v242 = vadd.f32 0.0, %v241
    %v243 = vpop.f32.mrb[0].mxu0
    %244 = vmatprep.mubr.f32.mxu0 0.0
    %245 = vmatmul.mubr.f32.gmra.mrb[0].mxu0 %v79
    %v246 = vpop.f32.mrb[0].mxu0
    %v247 = vadd.f32 0.0, %v246
    %v248 = vpop.f32.mrb[0].mxu0
    %249 = vmatprep.mubr.f32.mxu0 0.0
    %250 = vmatmul.mubr.f32.gmra.mrb[0].mxu0 %v82
    %v251 = vpop.f32.mrb[0].mxu0
    %v252 = vadd.f32 0.0, %v251
    %v253 = vpop.f32.mrb[0].mxu0
    %254 = vmatprep.mubr.f32.mxu0 0.0
    %255 = vmatmul.mubr.f32.gmra.mrb[0].mxu0 %v85
    %v256 = vpop.f32.mrb[0].mxu0
    %v257 = vadd.f32 0.0, %v256
    %v258 = vpop.f32.mrb[0].mxu0
    %259 = vmatprep.mubr.f32.mxu0 0.0
    %260 = vmatmul.mubr.f32.gmra.mrb[0].mxu0 %v88
    %v261 = vpop.f32.mrb[0].mxu0
    %v262 = vadd.f32 0.0, %v261
    %v263 = vpop.f32.mrb[0].mxu0
    %264 = vmatprep.mubr.f32.mxu0 0.0
    %265 = vmatmul.mubr.f32.gmra.mrb[0].mxu0 %v91
    %v266 = vpop.f32.mrb[0].mxu0
    %v267 = vadd.f32 0.0, %v266
    %v268 = vpop.f32.mrb[0].mxu0
    %269 = vmatprep.mubr.f32.mxu0 0.0
    %270 = vmatmul.mubr.f32.gmra.mrb[0].mxu0 %v94
    %v271 = vpop.f32.mrb[0].mxu0
    %v272 = vadd.f32 0.0, %v271
    %v273 = vpop.f32.mrb[0].mxu0
    %274 = vmatprep.mubr.f32.mxu0 0.0
    %275 = vmatmul.mubr.f32.gmra.mrb[0].mxu0 %v97
    %v276 = vpop.f32.mrb[0].mxu0
    %v277 = vadd.f32 0.0, %v276
    %v278 = vpop.f32.mrb[0].mxu0
    %279 = vmatprep.mubr.f32.mxu0 0.0
    %280 = vmatmul.mubr.f32.gmra.mrb[0].mxu0 %v100
    %v281 = vpop.f32.mrb[0].mxu0
    %v282 = vadd.f32 0.0, %v281
    %v283 = vpop.f32.mrb[0].mxu0
    %284 = vmatprep.mubr.f32.mxu0 0.0
    %285 = vmatmul.mubr.f32.gmra.mrb[0].mxu0 %v103
    %v286 = vpop.f32.mrb[0].mxu0
    %v287 = vadd.f32 0.0, %v286
    %v288 = vpop.f32.mrb[0].mxu0
    %289 = vmatprep.mubr.f32.mxu0 0.0
    %290 = vmatmul.mubr.f32.gmra.mrb[0].mxu0 %v106
    %v291 = vpop.f32.mrb[0].mxu0
    %v292 = vadd.f32 0.0, %v291
    %v293 = vpop.f32.mrb[0].mxu0
    %294 = vmatprep.mubr.f32.mxu0 0.0
    %295 = vmatmul.mubr.f32.gmra.mrb[0].mxu0 %v109
    %v296 = vpop.f32.mrb[0].mxu0
    %v297 = vadd.f32 0.0, %v296
    %v298 = vpop.f32.mrb[0].mxu0
    %299 = vmatprep.mubr.f32.mxu0 0.0
    %300 = vmatmul.mubr.f32.gmra.mrb[0].mxu0 %v112
    %v301 = vpop.f32.mrb[0].mxu0
    %v302 = vadd.f32 0.0, %v301
    %v303 = vpop.f32.mrb[0].mxu0
    %304 = vmatprep.mubr.f32.mxu0 0.0
    %305 = vmatmul.mubr.f32.gmra.mrb[0].mxu0 %v115
    %v306 = vpop.f32.mrb[0].mxu0
    %v307 = vadd.f32 0.0, %v306
    %v308 = vpop.f32.mrb[0].mxu0
    %309 = vdwg.mxu0
    %v310 = vmul.f32 %v232, 2.0
    %v311 = vmul.f32 %v237, 2.0
    %v312 = vmul.f32 %v242, 2.0
    %v313 = vmul.f32 %v247, 2.0
    %v314 = vmul.f32 %v252, 2.0
    %v315 = vmul.f32 %v257, 2.0
    %v316 = vmul.f32 %v262, 2.0
    %v317 = vmul.f32 %v267, 2.0
    %v318 = vmul.f32 %v272, 2.0
    %v319 = vmul.f32 %v277, 2.0
    %v320 = vmul.f32 %v282, 2.0
    %v321 = vmul.f32 %v287, 2.0
    %v322 = vmul.f32 %v292, 2.0
    %v323 = vmul.f32 %v297, 2.0
    %v324 = vmul.f32 %v302, 2.0
    %v325 = vmul.f32 %v307, 2.0
    %327 = vset.pattern.permute.xlu0 0
    %328 = vperm.xlu0 %327, %v52
    %v329 = vpop.permute.xlu0 %328
    %332 = vset.pattern.permute.xlu0 0
    %333 = vperm.xlu0 %332, %v53
    %v334 = vpop.permute.xlu0 %333
    %337 = vset.pattern.permute.xlu0 0
    %338 = vperm.xlu0 %337, %v54
    %v339 = vpop.permute.xlu0 %338
    %342 = vset.pattern.permute.xlu0 0
    %343 = vperm.xlu0 %342, %v55
    %v344 = vpop.permute.xlu0 %343
    %347 = vset.pattern.permute.xlu0 0
    %348 = vperm.xlu0 %347, %v56
    %v349 = vpop.permute.xlu0 %348
    %352 = vset.pattern.permute.xlu0 0
    %353 = vperm.xlu0 %352, %v57
    %v354 = vpop.permute.xlu0 %353
    %357 = vset.pattern.permute.xlu0 0
    %358 = vperm.xlu0 %357, %v58
    %v359 = vpop.permute.xlu0 %358
    %362 = vset.pattern.permute.xlu0 0
    %363 = vperm.xlu0 %362, %v59
    %v364 = vpop.permute.xlu0 %363
    %367 = vset.pattern.permute.xlu0 0
    %368 = vperm.xlu0 %367, %v60
    %v369 = vpop.permute.xlu0 %368
    %372 = vset.pattern.permute.xlu0 0
    %373 = vperm.xlu0 %372, %v61
    %v374 = vpop.permute.xlu0 %373
    %377 = vset.pattern.permute.xlu0 0
    %378 = vperm.xlu0 %377, %v62
    %v379 = vpop.permute.xlu0 %378
    %382 = vset.pattern.permute.xlu0 0
    %383 = vperm.xlu0 %382, %v63
    %v384 = vpop.permute.xlu0 %383
    %387 = vset.pattern.permute.xlu0 0
    %388 = vperm.xlu0 %387, %v64
    %v389 = vpop.permute.xlu0 %388
    %392 = vset.pattern.permute.xlu0 0
    %393 = vperm.xlu0 %392, %v65
    %v394 = vpop.permute.xlu0 %393
    %397 = vset.pattern.permute.xlu0 0
    %398 = vperm.xlu0 %397, %v66
    %v399 = vpop.permute.xlu0 %398
    %402 = vset.pattern.permute.xlu0 0
    %403 = vperm.xlu0 %402, %v67
    %v404 = vpop.permute.xlu0 %403
    %v406 = vsub.f32 %v329, %v310
    %v407 = vsub.f32 %v334, %v311
    %v408 = vsub.f32 %v339, %v312
    %v409 = vsub.f32 %v344, %v313
    %v410 = vsub.f32 %v349, %v314
    %v411 = vsub.f32 %v354, %v315
    %v412 = vsub.f32 %v359, %v316
    %v413 = vsub.f32 %v364, %v317
    %v414 = vsub.f32 %v369, %v318
    %v415 = vsub.f32 %v374, %v319
    %v416 = vsub.f32 %v379, %v320
    %v417 = vsub.f32 %v384, %v321
    %v418 = vsub.f32 %v389, %v322
    %v419 = vsub.f32 %v394, %v323
    %v420 = vsub.f32 %v399, %v324
    %v421 = vsub.f32 %v404, %v325
    %v422 = vmin.f32 %v406, %v410
    %v423 = vmin.f32 %v407, %v411
    %v424 = vmin.f32 %v408, %v412
    %v425 = vmin.f32 %v409, %v413
    %v426 = vmin.f32 %v422, %v414
    %v427 = vmin.f32 %v423, %v415
    %v428 = vmin.f32 %v424, %v416
    %v429 = vmin.f32 %v425, %v417
    %v430 = vmin.f32 %v426, %v418
    %v431 = vmin.f32 %v427, %v419
    %v432 = vmin.f32 %v428, %v420
    %v433 = vmin.f32 %v429, %v421
    %v434 = vmin.f32 %v430, %v431
    %v435 = vmin.f32 %v432, %v433
    %v436 = vmin.f32 %v434, %v435
    %v437 = vrot.slane %v436, 4
    %v438 = vmin.f32 %v436, %v437
    %v439 = vrot.slane %v438, 2
    %v440 = vmin.f32 %v438, %v439
    %v441 = vrot.slane %v440, 1
    %v442 = vmin.f32 %v440, %v441
    %v443 = vlaneseq
    %v444 = vshrl.u32 %v443, 7
    %v445 = vadd.s32 %v444, 8
    %v446 = vadd.s32 %v444, 16
    %v447 = vadd.s32 %v444, 24
    %v448 = vadd.s32 %v444, 32
    %v449 = vadd.s32 %v444, 40
    %v450 = vadd.s32 %v444, 48
    %v451 = vadd.s32 %v444, 56
    %v452 = vadd.s32 %v444, 64
    %v453 = vadd.s32 %v444, 72
    %v454 = vadd.s32 %v444, 80
    %v455 = vadd.s32 %v444, 88
    %v456 = vadd.s32 %v444, 96
    %v457 = vadd.s32 %v444, 104
    %v458 = vadd.s32 %v444, 112
    %v459 = vadd.s32 %v444, 120
    %vm460 = vcmp.eq.f32.partialorder %v406, %v442
    %vm461 = vcmp.eq.f32.partialorder %v407, %v442
    %vm462 = vcmp.eq.f32.partialorder %v408, %v442
    %vm463 = vcmp.eq.f32.partialorder %v409, %v442
    %vm464 = vcmp.eq.f32.partialorder %v410, %v442
    %vm465 = vcmp.eq.f32.partialorder %v411, %v442
    %vm466 = vcmp.eq.f32.partialorder %v412, %v442
    %vm467 = vcmp.eq.f32.partialorder %v413, %v442
    %vm468 = vcmp.eq.f32.partialorder %v414, %v442
    %vm469 = vcmp.eq.f32.partialorder %v415, %v442
    %vm470 = vcmp.eq.f32.partialorder %v416, %v442
    %vm471 = vcmp.eq.f32.partialorder %v417, %v442
    %vm472 = vcmp.eq.f32.partialorder %v418, %v442
    %vm473 = vcmp.eq.f32.partialorder %v419, %v442
    %vm474 = vcmp.eq.f32.partialorder %v420, %v442
    %vm475 = vcmp.eq.f32.partialorder %v421, %v442
    %v476 = vsel %vm460, %v444, 128
    %v477 = vsel %vm461, %v445, 128
    %v478 = vsel %vm462, %v446, 128
    %v479 = vsel %vm463, %v447, 128
    %v480 = vsel %vm464, %v448, 128
    %v481 = vsel %vm465, %v449, 128
    %v482 = vsel %vm466, %v450, 128
    %v483 = vsel %vm467, %v451, 128
    %v484 = vsel %vm468, %v452, 128
    %v485 = vsel %vm469, %v453, 128
    %v486 = vsel %vm470, %v454, 128
    %v487 = vsel %vm471, %v455, 128
    %v488 = vsel %vm472, %v456, 128
    %v489 = vsel %vm473, %v457, 128
    %v490 = vsel %vm474, %v458, 128
    %v491 = vsel %vm475, %v459, 128
    %vm492 = vcmp.lt.s32.totalorder %v476, %v480
    %v493 = vsel %vm492, %v476, %v480
    %vm494 = vcmp.lt.s32.totalorder %v477, %v481
    %v495 = vsel %vm494, %v477, %v481
    %vm496 = vcmp.lt.s32.totalorder %v478, %v482
    %v497 = vsel %vm496, %v478, %v482
    %vm498 = vcmp.lt.s32.totalorder %v479, %v483
    %v499 = vsel %vm498, %v479, %v483
    %vm500 = vcmp.lt.s32.totalorder %v493, %v484
    %v501 = vsel %vm500, %v493, %v484
    %vm502 = vcmp.lt.s32.totalorder %v495, %v485
    %v503 = vsel %vm502, %v495, %v485
    %vm504 = vcmp.lt.s32.totalorder %v497, %v486
    %v505 = vsel %vm504, %v497, %v486
    %vm506 = vcmp.lt.s32.totalorder %v499, %v487
    %v507 = vsel %vm506, %v499, %v487
    %vm508 = vcmp.lt.s32.totalorder %v501, %v488
    %v509 = vsel %vm508, %v501, %v488
    %vm510 = vcmp.lt.s32.totalorder %v503, %v489
    %v511 = vsel %vm510, %v503, %v489
    %vm512 = vcmp.lt.s32.totalorder %v505, %v490
    %v513 = vsel %vm512, %v505, %v490
    %vm514 = vcmp.lt.s32.totalorder %v507, %v491
    %v515 = vsel %vm514, %v507, %v491
    %vm516 = vcmp.lt.s32.totalorder %v509, %v511
    %v517 = vsel %vm516, %v509, %v511
    %vm518 = vcmp.lt.s32.totalorder %v513, %v515
    %v519 = vsel %vm518, %v513, %v515
    %vm520 = vcmp.lt.s32.totalorder %v517, %v519
    %v521 = vsel %vm520, %v517, %v519
    %v522 = vrot.slane %v521, 4
    %vm523 = vcmp.lt.s32.totalorder %v521, %v522
    %v524 = vsel %vm523, %v521, %v522
    %v525 = vrot.slane %v524, 2
    %vm526 = vcmp.lt.s32.totalorder %v524, %v525
    %v527 = vsel %vm526, %v524, %v525
    %v528 = vrot.slane %v527, 1
    %vm529 = vcmp.lt.s32.totalorder %v527, %v528
    %v530 = vsel %vm529, %v527, %v528
    %vm531 = vcmp.eq.s32.totalorder %v444, %v530
    %vm532 = vcmp.eq.s32.totalorder %v445, %v530
    %vm533 = vcmp.eq.s32.totalorder %v446, %v530
    %vm534 = vcmp.eq.s32.totalorder %v447, %v530
    %vm535 = vcmp.eq.s32.totalorder %v448, %v530
    %vm536 = vcmp.eq.s32.totalorder %v449, %v530
    %vm537 = vcmp.eq.s32.totalorder %v450, %v530
    %vm538 = vcmp.eq.s32.totalorder %v451, %v530
    %vm539 = vcmp.eq.s32.totalorder %v452, %v530
    %vm540 = vcmp.eq.s32.totalorder %v453, %v530
    %vm541 = vcmp.eq.s32.totalorder %v454, %v530
    %vm542 = vcmp.eq.s32.totalorder %v455, %v530
    %vm543 = vcmp.eq.s32.totalorder %v456, %v530
    %vm544 = vcmp.eq.s32.totalorder %v457, %v530
    %vm545 = vcmp.eq.s32.totalorder %v458, %v530
    %vm546 = vcmp.eq.s32.totalorder %v459, %v530
    %v547 = vsel %vm531, 1, 0
    %v548 = vsel %vm532, 1, 0
    %v549 = vsel %vm533, 1, 0
    %v550 = vsel %vm534, 1, 0
    %v551 = vsel %vm535, 1, 0
    %v552 = vsel %vm536, 1, 0
    %v553 = vsel %vm537, 1, 0
    %v554 = vsel %vm538, 1, 0
    %v555 = vsel %vm539, 1, 0
    %v556 = vsel %vm540, 1, 0
    %v557 = vsel %vm541, 1, 0
    %v558 = vsel %vm542, 1, 0
    %v559 = vsel %vm543, 1, 0
    %v560 = vsel %vm544, 1, 0
    %v561 = vsel %vm545, 1, 0
    %v562 = vsel %vm546, 1, 0
    %v563 = vcvt.s32.f32 %v547
    %v564 = vcvt.s32.f32 %v548
    %v565 = vcvt.s32.f32 %v549
    %v566 = vcvt.s32.f32 %v550
    %v567 = vcvt.s32.f32 %v551
    %v568 = vcvt.s32.f32 %v552
    %v569 = vcvt.s32.f32 %v553
    %v570 = vcvt.s32.f32 %v554
    %v571 = vcvt.s32.f32 %v555
    %v572 = vcvt.s32.f32 %v556
    %v573 = vcvt.s32.f32 %v557
    %v574 = vcvt.s32.f32 %v558
    %v575 = vcvt.s32.f32 %v559
    %v576 = vcvt.s32.f32 %v560
    %v577 = vcvt.s32.f32 %v561
    %v578 = vcvt.s32.f32 %v562
    %579 = vxpose.xlu0.b32.start [1/16] %v563, 128
    %580 = vxpose.xlu0.b32.cont [2/16] %v564, 128
    %581 = vxpose.xlu0.b32.cont [3/16] %v565, 128
    %582 = vxpose.xlu0.b32.cont [4/16] %v566, 128
    %583 = vxpose.xlu0.b32.cont [5/16] %v567, 128
    %584 = vxpose.xlu0.b32.cont [6/16] %v568, 128
    %585 = vxpose.xlu0.b32.cont [7/16] %v569, 128
    %586 = vxpose.xlu0.b32.cont [8/16] %v570, 128
    %587 = vxpose.xlu0.b32.cont [9/16] %v571, 128
    %588 = vxpose.xlu0.b32.cont [10/16] %v572, 128
    %589 = vxpose.xlu0.b32.cont [11/16] %v573, 128
    %590 = vxpose.xlu0.b32.cont [12/16] %v574, 128
    %591 = vxpose.xlu0.b32.cont [13/16] %v575, 128
    %592 = vxpose.xlu0.b32.cont [14/16] %v576, 128
    %593 = vxpose.xlu0.b32.cont [15/16] %v577, 128
    %594 = vxpose.xlu0.b32.end [16/16] %v578, 128
    %v595 = vpop.trf.xlu0
    %v596 = vpop.trf.xlu0
    %v597 = vpop.trf.xlu0
    %v598 = vpop.trf.xlu0
    %v599 = vpop.trf.xlu0
    %v600 = vpop.trf.xlu0
    %v601 = vpop.trf.xlu0
    %v602 = vpop.trf.xlu0
    %v603 = vpop.trf.xlu0
    %v604 = vpop.trf.xlu0
    %v605 = vpop.trf.xlu0
    %v606 = vpop.trf.xlu0
    %v607 = vpop.trf.xlu0
    %v608 = vpop.trf.xlu0
    %v609 = vpop.trf.xlu0
    %v610 = vpop.trf.xlu0
    %611 = vmatprep.subr.mxu0 0.0
    %612 = vmatpush1.msra.mxu0 %v36
    %613 = vmatprep.subr.mxu0 0.0
    %614 = vmatpush1.msra.mxu0 %v37
    %615 = vmatprep.subr.mxu0 0.0
    %616 = vmatpush1.msra.mxu0 %v38
    %617 = vmatprep.subr.mxu0 0.0
    %618 = vmatpush1.msra.mxu0 %v39
    %619 = vmatprep.subr.mxu0 0.0
    %620 = vmatpush1.msra.mxu0 %v40
    %621 = vmatprep.subr.mxu0 0.0
    %622 = vmatpush1.msra.mxu0 %v41
    %623 = vmatprep.subr.mxu0 0.0
    %624 = vmatpush1.msra.mxu0 %v42
    %625 = vmatprep.subr.mxu0 0.0
    %626 = vmatpush1.msra.mxu0 %v43
    %627 = vmatprep.subr.mxu0 0.0
    %628 = vmatpush1.msra.mxu0 %v44
    %629 = vmatprep.subr.mxu0 0.0
    %630 = vmatpush1.msra.mxu0 %v45
    %631 = vmatprep.subr.mxu0 0.0
    %632 = vmatpush1.msra.mxu0 %v46
    %633 = vmatprep.subr.mxu0 0.0
    %634 = vmatpush1.msra.mxu0 %v47
    %635 = vmatprep.subr.mxu0 0.0
    %636 = vmatpush1.msra.mxu0 %v48
    %637 = vmatprep.subr.mxu0 0.0
    %638 = vmatpush1.msra.mxu0 %v49
    %639 = vmatprep.subr.mxu0 0.0
    %640 = vmatpush1.msra.mxu0 %v50
    %641 = vmatprep.subr.mxu0 0.0
    %642 = vmatpush1.msra.mxu0 %v51
    %643 = vmatprep.subr.mxu0 0.0
    %644 = vmatpush1.msra.mxu0 0.0
    %645 = vmatprep.subr.mxu0 0.0
    %646 = vmatpush1.msra.mxu0 0.0
    %647 = vmatprep.subr.mxu0 0.0
    %648 = vmatpush1.msra.mxu0 0.0
    %649 = vmatprep.subr.mxu0 0.0
    %650 = vmatpush1.msra.mxu0 0.0
    %651 = vmatprep.subr.mxu0 0.0
    %652 = vmatpush1.msra.mxu0 0.0
    %653 = vmatprep.subr.mxu0 0.0
    %654 = vmatpush1.msra.mxu0 0.0
    %655 = vmatprep.subr.mxu0 0.0
    %656 = vmatpush1.msra.mxu0 0.0
    %657 = vmatprep.subr.mxu0 0.0
    %658 = vmatpush1.msra.mxu0 0.0
    %659 = vmatprep.subr.mxu0 0.0
    %660 = vmatpush1.msra.mxu0 0.0
    %661 = vmatprep.subr.mxu0 0.0
    %662 = vmatpush1.msra.mxu0 0.0
    %663 = vmatprep.subr.mxu0 0.0
    %664 = vmatpush1.msra.mxu0 0.0
    %665 = vmatprep.subr.mxu0 0.0
    %666 = vmatpush1.msra.mxu0 0.0
    %667 = vmatprep.subr.mxu0 0.0
    %668 = vmatpush1.msra.mxu0 0.0
    %669 = vmatprep.subr.mxu0 0.0
    %670 = vmatpush1.msra.mxu0 0.0
    %671 = vmatprep.subr.mxu0 0.0
    %672 = vmatpush1.msra.mxu0 0.0
    %673 = vmatprep.subr.mxu0 0.0
    %674 = vmatpush1.msra.mxu0 0.0
    %675 = vmatprep.mubr.f32.mxu0 0.0
    %676 = vmatmul.mubr.f32.gmra.mrb[0].mxu0 %v595
    %v677 = vpop.f32.mrb[0].mxu0
    %v678 = vadd.f32 0.0, %v677
    %v679 = vpop.f32.mrb[0].mxu0
    %680 = vmatprep.mubr.f32.mxu0 0.0
    %681 = vmatmul.mubr.f32.gmra.mrb[0].mxu0 %v596
    %v682 = vpop.f32.mrb[0].mxu0
    %v683 = vadd.f32 0.0, %v682
    %v684 = vpop.f32.mrb[0].mxu0
    %685 = vmatprep.mubr.f32.mxu0 0.0
    %686 = vmatmul.mubr.f32.gmra.mrb[0].mxu0 %v597
    %v687 = vpop.f32.mrb[0].mxu0
    %v688 = vadd.f32 0.0, %v687
    %v689 = vpop.f32.mrb[0].mxu0
    %690 = vmatprep.mubr.f32.mxu0 0.0
    %691 = vmatmul.mubr.f32.gmra.mrb[0].mxu0 %v598
    %v692 = vpop.f32.mrb[0].mxu0
    %v693 = vadd.f32 0.0, %v692
    %v694 = vpop.f32.mrb[0].mxu0
    %695 = vmatprep.mubr.f32.mxu0 0.0
    %696 = vmatmul.mubr.f32.gmra.mrb[0].mxu0 %v599
    %v697 = vpop.f32.mrb[0].mxu0
    %v698 = vadd.f32 0.0, %v697
    %v699 = vpop.f32.mrb[0].mxu0
    %700 = vmatprep.mubr.f32.mxu0 0.0
    %701 = vmatmul.mubr.f32.gmra.mrb[0].mxu0 %v600
    %v702 = vpop.f32.mrb[0].mxu0
    %v703 = vadd.f32 0.0, %v702
    %v704 = vpop.f32.mrb[0].mxu0
    %705 = vmatprep.mubr.f32.mxu0 0.0
    %706 = vmatmul.mubr.f32.gmra.mrb[0].mxu0 %v601
    %v707 = vpop.f32.mrb[0].mxu0
    %v708 = vadd.f32 0.0, %v707
    %v709 = vpop.f32.mrb[0].mxu0
    %710 = vmatprep.mubr.f32.mxu0 0.0
    %711 = vmatmul.mubr.f32.gmra.mrb[0].mxu0 %v602
    %v712 = vpop.f32.mrb[0].mxu0
    %v713 = vadd.f32 0.0, %v712
    %v714 = vpop.f32.mrb[0].mxu0
    %715 = vmatprep.mubr.f32.mxu0 0.0
    %716 = vmatmul.mubr.f32.gmra.mrb[0].mxu0 %v603
    %v717 = vpop.f32.mrb[0].mxu0
    %v718 = vadd.f32 0.0, %v717
    %v719 = vpop.f32.mrb[0].mxu0
    %720 = vmatprep.mubr.f32.mxu0 0.0
    %721 = vmatmul.mubr.f32.gmra.mrb[0].mxu0 %v604
    %v722 = vpop.f32.mrb[0].mxu0
    %v723 = vadd.f32 0.0, %v722
    %v724 = vpop.f32.mrb[0].mxu0
    %725 = vmatprep.mubr.f32.mxu0 0.0
    %726 = vmatmul.mubr.f32.gmra.mrb[0].mxu0 %v605
    %v727 = vpop.f32.mrb[0].mxu0
    %v728 = vadd.f32 0.0, %v727
    %v729 = vpop.f32.mrb[0].mxu0
    %730 = vmatprep.mubr.f32.mxu0 0.0
    %731 = vmatmul.mubr.f32.gmra.mrb[0].mxu0 %v606
    %v732 = vpop.f32.mrb[0].mxu0
    %v733 = vadd.f32 0.0, %v732
    %v734 = vpop.f32.mrb[0].mxu0
    %735 = vmatprep.mubr.f32.mxu0 0.0
    %736 = vmatmul.mubr.f32.gmra.mrb[0].mxu0 %v607
    %v737 = vpop.f32.mrb[0].mxu0
    %v738 = vadd.f32 0.0, %v737
    %v739 = vpop.f32.mrb[0].mxu0
    %740 = vmatprep.mubr.f32.mxu0 0.0
    %741 = vmatmul.mubr.f32.gmra.mrb[0].mxu0 %v608
    %v742 = vpop.f32.mrb[0].mxu0
    %v743 = vadd.f32 0.0, %v742
    %v744 = vpop.f32.mrb[0].mxu0
    %745 = vmatprep.mubr.f32.mxu0 0.0
    %746 = vmatmul.mubr.f32.gmra.mrb[0].mxu0 %v609
    %v747 = vpop.f32.mrb[0].mxu0
    %v748 = vadd.f32 0.0, %v747
    %v749 = vpop.f32.mrb[0].mxu0
    %750 = vmatprep.mubr.f32.mxu0 0.0
    %751 = vmatmul.mubr.f32.gmra.mrb[0].mxu0 %v610
    %v752 = vpop.f32.mrb[0].mxu0
    %v753 = vadd.f32 0.0, %v752
    %v754 = vpop.f32.mrb[0].mxu0
    %755 = vdwg.mxu0
    %v756 = vsub.f32 %v678, %v20
    %v757 = vsub.f32 %v683, %v21
    %v758 = vsub.f32 %v688, %v22
    %v759 = vsub.f32 %v693, %v23
    %v760 = vsub.f32 %v698, %v24
    %v761 = vsub.f32 %v703, %v25
    %v762 = vsub.f32 %v708, %v26
    %v763 = vsub.f32 %v713, %v27
    %v764 = vsub.f32 %v718, %v28
    %v765 = vsub.f32 %v723, %v29
    %v766 = vsub.f32 %v728, %v30
    %v767 = vsub.f32 %v733, %v31
    %v768 = vsub.f32 %v738, %v32
    %v769 = vsub.f32 %v743, %v33
    %v770 = vsub.f32 %v748, %v34
    %v771 = vsub.f32 %v753, %v35
    %v772 = vmul.f32 %v756, %v756
    %v773 = vmul.f32 %v757, %v757
    %v774 = vmul.f32 %v758, %v758
    %v775 = vmul.f32 %v759, %v759
    %v776 = vmul.f32 %v760, %v760
    %v777 = vmul.f32 %v761, %v761
    %v778 = vmul.f32 %v762, %v762
    %v779 = vmul.f32 %v763, %v763
    %v780 = vmul.f32 %v764, %v764
    %v781 = vmul.f32 %v765, %v765
    %v782 = vmul.f32 %v766, %v766
    %v783 = vmul.f32 %v767, %v767
    %v784 = vmul.f32 %v768, %v768
    %v785 = vmul.f32 %v769, %v769
    %v786 = vmul.f32 %v770, %v770
    %v787 = vmul.f32 %v771, %v771
    %v788 = vsel %vm68, %v772, 0.0
    %v789 = vsel %vm68, %v773, 0.0
    %v790 = vadd.f32 %v788, %v789
    %v791 = vsel %vm68, %v774, 0.0
    %v792 = vadd.f32 %v790, %v791
    %v793 = vsel %vm68, %v775, 0.0
    %v794 = vadd.f32 %v792, %v793
    %v795 = vsel %vm68, %v776, 0.0
    %v796 = vadd.f32 %v794, %v795
    %v797 = vsel %vm68, %v777, 0.0
    %v798 = vadd.f32 %v796, %v797
    %v799 = vsel %vm68, %v778, 0.0
    %v800 = vadd.f32 %v798, %v799
    %v801 = vsel %vm68, %v779, 0.0
    %v802 = vadd.f32 %v800, %v801
    %v803 = vsel %vm68, %v780, 0.0
    %v804 = vadd.f32 %v802, %v803
    %v805 = vsel %vm68, %v781, 0.0
    %v806 = vadd.f32 %v804, %v805
    %v807 = vsel %vm68, %v782, 0.0
    %v808 = vadd.f32 %v806, %v807
    %v809 = vsel %vm68, %v783, 0.0
    %v810 = vadd.f32 %v808, %v809
    %v811 = vsel %vm68, %v784, 0.0
    %v812 = vadd.f32 %v810, %v811
    %v813 = vsel %vm68, %v785, 0.0
    %v814 = vadd.f32 %v812, %v813
    %v815 = vsel %vm68, %v786, 0.0
    %v816 = vadd.f32 %v814, %v815
    %v817 = vsel %vm68, %v787, 0.0
    %v818 = vadd.f32 %v816, %v817
    %819 = vadd.xlane.f32.xlu0 %v818
    %v820 = vpop.xlane.xlu0 %819
    %v821 = vrot.slane %v820, 4
    %v822 = vadd.f32 %v820, %v821
    %v823 = vrot.slane %v822, 2
    %v824 = vadd.f32 %v822, %v823
    %v825 = vrot.slane %v824, 1
    %v826 = vadd.f32 %v824, %v825
    %s827 = vtos %v826
    %828 = vadd.xlane.f32.xlu0 %v563
    %v829 = vpop.xlane.xlu0 %828
    %830 = vadd.xlane.f32.xlu0 %v564
    %v831 = vpop.xlane.xlu0 %830
    %832 = vadd.xlane.f32.xlu0 %v565
    %v833 = vpop.xlane.xlu0 %832
    %834 = vadd.xlane.f32.xlu0 %v566
    %v835 = vpop.xlane.xlu0 %834
    %836 = vadd.xlane.f32.xlu0 %v567
    %v837 = vpop.xlane.xlu0 %836
    %838 = vadd.xlane.f32.xlu0 %v568
    %v839 = vpop.xlane.xlu0 %838
    %840 = vadd.xlane.f32.xlu0 %v569
    %v841 = vpop.xlane.xlu0 %840
    %842 = vadd.xlane.f32.xlu0 %v570
    %v843 = vpop.xlane.xlu0 %842
    %844 = vadd.xlane.f32.xlu0 %v571
    %v845 = vpop.xlane.xlu0 %844
    %846 = vadd.xlane.f32.xlu0 %v572
    %v847 = vpop.xlane.xlu0 %846
    %848 = vadd.xlane.f32.xlu0 %v573
    %v849 = vpop.xlane.xlu0 %848
    %850 = vadd.xlane.f32.xlu0 %v574
    %v851 = vpop.xlane.xlu0 %850
    %852 = vadd.xlane.f32.xlu0 %v575
    %v853 = vpop.xlane.xlu0 %852
    %854 = vadd.xlane.f32.xlu0 %v576
    %v855 = vpop.xlane.xlu0 %854
    %856 = vadd.xlane.f32.xlu0 %v577
    %v857 = vpop.xlane.xlu0 %856
    %858 = vadd.xlane.f32.xlu0 %v578
    %v859 = vpop.xlane.xlu0 %858
    %860 = vst.msk [vmem:[%s3] sm:$0xff] %vm68, %v678
    %861 = vst.msk [vmem:[%s3 + $0x8] sm:$0xff] %vm68, %v683
    %862 = vst.msk [vmem:[%s3 + $0x10] sm:$0xff] %vm68, %v688
    %863 = vst.msk [vmem:[%s3 + $0x18] sm:$0xff] %vm68, %v693
    %864 = vst.msk [vmem:[%s3 + $0x20] sm:$0xff] %vm68, %v698
    %865 = vst.msk [vmem:[%s3 + $0x28] sm:$0xff] %vm68, %v703
    %866 = vst.msk [vmem:[%s3 + $0x30] sm:$0xff] %vm68, %v708
    %867 = vst.msk [vmem:[%s3 + $0x38] sm:$0xff] %vm68, %v713
    %868 = vst.msk [vmem:[%s3 + $0x40] sm:$0xff] %vm68, %v718
    %869 = vst.msk [vmem:[%s3 + $0x48] sm:$0xff] %vm68, %v723
    %870 = vst.msk [vmem:[%s3 + $0x50] sm:$0xff] %vm68, %v728
    %871 = vst.msk [vmem:[%s3 + $0x58] sm:$0xff] %vm68, %v733
    %872 = vst.msk [vmem:[%s3 + $0x60] sm:$0xff] %vm68, %v738
    %873 = vst.msk [vmem:[%s3 + $0x68] sm:$0xff] %vm68, %v743
    %874 = vst.msk [vmem:[%s3 + $0x70] sm:$0xff] %vm68, %v748
    %875 = vst.msk [vmem:[%s3 + $0x78] sm:$0xff] %vm68, %v753
    %876 = vst [vmem:[#allocation2] sm:$0x1] %v530
    %v893 = vlaneseq
    %v894 = vand.u32 %v893, 127
    %v895 = vlaneseq
    %v896 = vshrl.u32 %v895, 7
    %v897 = vsub.s32 %v894, %v896
    %v898 = vrot.slane %v829, %v897
    %v899 = vadd.s32 %v894, 4294967288
    %v900 = vlaneseq
    %v901 = vshrl.u32 %v900, 7
    %v902 = vsub.s32 %v899, %v901
    %v903 = vrot.slane %v831, %v902
    %vm904 = vcmask 130112
    %v905 = vsel %vm904, %v903, %v898
    %v906 = vadd.s32 %v894, 4294967280
    %v907 = vlaneseq
    %v908 = vshrl.u32 %v907, 7
    %v909 = vsub.s32 %v906, %v908
    %v910 = vrot.slane %v833, %v909
    %vm911 = vcmask 195712
    %v912 = vsel %vm911, %v910, %v905
    %v913 = vadd.s32 %v894, 4294967272
    %v914 = vlaneseq
    %v915 = vshrl.u32 %v914, 7
    %v916 = vsub.s32 %v913, %v915
    %v917 = vrot.slane %v835, %v916
    %vm918 = vcmask 261312
    %v919 = vsel %vm918, %v917, %v912
    %v920 = vadd.s32 %v894, 4294967264
    %v921 = vlaneseq
    %v922 = vshrl.u32 %v921, 7
    %v923 = vsub.s32 %v920, %v922
    %v924 = vrot.slane %v837, %v923
    %vm925 = vcmask 326912
    %v926 = vsel %vm925, %v924, %v919
    %v927 = vadd.s32 %v894, 4294967256
    %v928 = vlaneseq
    %v929 = vshrl.u32 %v928, 7
    %v930 = vsub.s32 %v927, %v929
    %v931 = vrot.slane %v839, %v930
    %vm932 = vcmask 392512
    %v933 = vsel %vm932, %v931, %v926
    %v934 = vadd.s32 %v894, 4294967248
    %v935 = vlaneseq
    %v936 = vshrl.u32 %v935, 7
    %v937 = vsub.s32 %v934, %v936
    %v938 = vrot.slane %v841, %v937
    %vm939 = vcmask 458112
    %v940 = vsel %vm939, %v938, %v933
    %v941 = vadd.s32 %v894, 4294967240
    %v942 = vlaneseq
    %v943 = vshrl.u32 %v942, 7
    %v944 = vsub.s32 %v941, %v943
    %v945 = vrot.slane %v843, %v944
    %vm946 = vcmask 523712
    %v947 = vsel %vm946, %v945, %v940
    %v948 = vadd.s32 %v894, 4294967232
    %v949 = vlaneseq
    %v950 = vshrl.u32 %v949, 7
    %v951 = vsub.s32 %v948, %v950
    %v952 = vrot.slane %v845, %v951
    %vm953 = vcmask 589312
    %v954 = vsel %vm953, %v952, %v947
    %v955 = vadd.s32 %v894, 4294967224
    %v956 = vlaneseq
    %v957 = vshrl.u32 %v956, 7
    %v958 = vsub.s32 %v955, %v957
    %v959 = vrot.slane %v847, %v958
    %vm960 = vcmask 654912
    %v961 = vsel %vm960, %v959, %v954
    %v962 = vadd.s32 %v894, 4294967216
    %v963 = vlaneseq
    %v964 = vshrl.u32 %v963, 7
    %v965 = vsub.s32 %v962, %v964
    %v966 = vrot.slane %v849, %v965
    %vm967 = vcmask 720512
    %v968 = vsel %vm967, %v966, %v961
    %v969 = vadd.s32 %v894, 4294967208
    %v970 = vlaneseq
    %v971 = vshrl.u32 %v970, 7
    %v972 = vsub.s32 %v969, %v971
    %v973 = vrot.slane %v851, %v972
    %vm974 = vcmask 786112
    %v975 = vsel %vm974, %v973, %v968
    %v976 = vadd.s32 %v894, 4294967200
    %v977 = vlaneseq
    %v978 = vshrl.u32 %v977, 7
    %v979 = vsub.s32 %v976, %v978
    %v980 = vrot.slane %v853, %v979
    %vm981 = vcmask 851712
    %v982 = vsel %vm981, %v980, %v975
    %v983 = vadd.s32 %v894, 4294967192
    %v984 = vlaneseq
    %v985 = vshrl.u32 %v984, 7
    %v986 = vsub.s32 %v983, %v985
    %v987 = vrot.slane %v855, %v986
    %vm988 = vcmask 917312
    %v989 = vsel %vm988, %v987, %v982
    %v990 = vadd.s32 %v894, 4294967184
    %v991 = vlaneseq
    %v992 = vshrl.u32 %v991, 7
    %v993 = vsub.s32 %v990, %v992
    %v994 = vrot.slane %v857, %v993
    %vm995 = vcmask 982912
    %v996 = vsel %vm995, %v994, %v989
    %v997 = vadd.s32 %v894, 4294967176
    %v998 = vlaneseq
    %v999 = vshrl.u32 %v998, 7
    %v1000 = vsub.s32 %v997, %v999
    %v1001 = vrot.slane %v859, %v1000
    %vm1002 = vcmask 1048512
    %v1003 = vsel %vm1002, %v1001, %v996
    %1005 = vst [vmem:[#allocation4] sm:$0x1] %v1003
    %v1006 = vstv %s827
    %1007 = vst [vmem:[#allocation6] sm:$0x1] %v1006
    // Predicated region
    $region14: #{tpu_custom_call.1} parent=1 // pred_check
      _
    $region15: #{tpu_custom_call.1} parent=1 // pred_check_branch
      %1009 = sbr.rel (0) target = $region17
    $region16: #{tpu_custom_call.1} parent=1 // pred_region
      _
    $region17: #{tpu_custom_call.1} parent=1 // pred_fallthru
      _
    // Predicated region
    $region18: #{tpu_custom_call.1} parent=1 // pred_check
      _
    $region19: #{tpu_custom_call.1} parent=1 // pred_check_branch
      %1011 = sbr.rel (0) target = $region21
    $region20: #{tpu_custom_call.1} parent=1 // pred_region
      %s1013 = ssub.s32 16, 16
      %1014 = vsyncadd [#allocation3], %s1013
      %s1016 = sshll.u32 [#allocation2], 4
      %s1017 = int_to_ptr.vmem [resolvable:$true] %s1016
      %1019 = dma.vmem_to_hbm [thread:$0]  %s1017, 16, %s4, [#allocation3]
    $region21: #{tpu_custom_call.1} parent=1 // pred_fallthru
      _
    // Predicated region
    $region22: #{tpu_custom_call.1} parent=1 // pred_check
      _
    $region23: #{tpu_custom_call.1} parent=1 // pred_check_branch
      %1021 = sbr.rel (0) target = $region25
    $region24: #{tpu_custom_call.1} parent=1 // pred_region
      %s1023 = ssub.s32 16, 16
      %1024 = vsyncadd [#allocation5], %s1023
      %s1026 = sshll.u32 [#allocation4], 4
      %s1027 = int_to_ptr.vmem [resolvable:$true] %s1026
      %1029 = dma.vmem_to_hbm [thread:$0]  %s1027, 16, %s5, [#allocation5]
    $region25: #{tpu_custom_call.1} parent=1 // pred_fallthru
      _
    // Predicated region
    $region26: #{tpu_custom_call.1} parent=1 // pred_check
      _
    $region27: #{tpu_custom_call.1} parent=1 // pred_check_branch
      %1031 = sbr.rel (0) target = $region29
    $region28: #{tpu_custom_call.1} parent=1 // pred_region
      %s1033 = ssub.s32 16, 16
      %1034 = vsyncadd [#allocation5], %s1033
      %s1036 = sshll.u32 [#allocation6], 4
      %s1037 = int_to_ptr.vmem [resolvable:$true] %s1036
      %1039 = dma.vmem_to_hbm [thread:$0]  %s1037, 16, %s6, [#allocation5]
    $region29: #{tpu_custom_call.1} parent=1 // pred_fallthru
      _
    // Predicated region
    $region30: #{tpu_custom_call.1} parent=1 // pred_check
      _
    $region31: #{tpu_custom_call.1} parent=1 // pred_check_branch
      %1041 = sbr.rel (0) target = $region33
    $region32: #{tpu_custom_call.1} parent=1 // pred_region
      _
    $region33: #{tpu_custom_call.1} parent=1 // pred_fallthru
      _
    // Predicated region
    $region34: #{tpu_custom_call.1} parent=1 // pred_check
      _
    $region35: #{tpu_custom_call.1} parent=1 // pred_check_branch
      %1043 = sbr.rel (0) target = $region37
    $region36: #{tpu_custom_call.1} parent=1 // pred_region
      %1044 = dma.done [#allocation3], 16
    $region37: #{tpu_custom_call.1} parent=1 // pred_fallthru
      _
    // Predicated region
    $region38: #{tpu_custom_call.1} parent=1 // pred_check
      _
    $region39: #{tpu_custom_call.1} parent=1 // pred_check_branch
      %1046 = sbr.rel (0) target = $region41
    $region40: #{tpu_custom_call.1} parent=1 // pred_region
      %1047 = dma.done [#allocation5], 16
    $region41: #{tpu_custom_call.1} parent=1 // pred_fallthru
      _
    // Predicated region
    $region42: #{tpu_custom_call.1} parent=1 // pred_check
      _
    $region43: #{tpu_custom_call.1} parent=1 // pred_check_branch
      %1049 = sbr.rel (0) target = $region45
    $region44: #{tpu_custom_call.1} parent=1 // pred_region
      %1050 = dma.done [#allocation5], 16
    $region45: #{tpu_custom_call.1} parent=1 // pred_fallthru
      _
    %1051 = vsyncpa [#allocation3], 1
    %1052 = vsyncpa [#allocation5], 1

</llo_original>
